<compile_context>
chip_gen: v5e
topology: v5e:2x2
jax: 0.10.0
libtpu: 0.0.40
codegen_flags: <defaults>
</compile_context>

<pallas_src>
import jax
import jax.numpy as jnp
from jax.experimental import pallas as pl
from jax.experimental.pallas import tpu as pltpu


def _round_up(x, m):
    return (x + m - 1) // m * m


def _agru_kernel(bs_ref,                  # scalar prefetch: (Tp,) int32 in SMEM
                 x_ref,                   # (TT, TB, Dp)  f32
                 att_ref,                 # (TT, TB, 1)   f32
                 wi_ref,                  # (Dp, 2*Hp)    bf16   [W_ir^T | W_in^T]
                 wh_ref,                  # (Hp, 2*Hp)    bf16   [W_hr^T | W_hn^T]
                 b_ref,                   # (1, 2*Hp)     f32    [b_hh_r | b_hh_n]
                 out_ref,                 # (TT, TB, Hp)  f32
                 hx_ref):                 # scratch VMEM (TB, Hp) f32
    b_blk = pl.program_id(0)
    t_blk = pl.program_id(1)
    tt_steps = x_ref.shape[0]             # static time-block length
    tb, hp = hx_ref.shape

    # hx = zeros(max_batch_size, hidden_size) at the start of each batch block.
    @pl.when(t_blk == 0)
    def _():
        hx_ref[...] = jnp.zeros_like(hx_ref)

    # Resident operands, hoisted out of the time loop.
    wi = wi_ref[...]
    wh = wh_ref[...]
    b_rn = b_ref[...]                                           # (1, 2Hp)
    # Global batch-row ids for the packed-sequence mask.
    row = jax.lax.broadcasted_iota(jnp.int32, (tb, hp), 0) + b_blk * tb

    def step(tt, h):
        t = t_blk * tt_steps + tt
        x = x_ref[tt]                                           # (TB, Dp) f32
        att = att_ref[tt]                                       # (TB, 1)  f32

        # AGRUCell: gi = F.linear(x, W_ih, bias_hh); gh = F.linear(h, W_hh, bias_hh)
        # (reference adds bias_hh to BOTH — reproduced exactly).  Fused r|n matmuls.
        gi = jnp.dot(x.astype(jnp.bfloat16), wi,
                     preferred_element_type=jnp.float32) + b_rn
        gh = jnp.dot(h.astype(jnp.bfloat16), wh,
                     preferred_element_type=jnp.float32) + b_rn
        i_r, i_n = gi[:, :hp], gi[:, hp:]
        h_r, h_n = gh[:, :hp], gh[:, hp:]

        reset_gate = jax.nn.sigmoid(i_r + h_r)
        new_state = jnp.tanh(i_n + reset_gate * h_n)
        hy = (1.0 - att) * h + att * new_state                  # att bcast over H

        # Packed-sequence semantics: only the first batch_sizes[t] rows advance.
        active = row < bs_ref[t]
        out_ref[tt] = jnp.where(active, hy, 0.0).astype(out_ref.dtype)
        return jnp.where(active, hy, h)

    hx_ref[...] = jax.lax.fori_loop(0, tt_steps, step, hx_ref[...], unroll=True)


def dynamic_agru(inputs, att_scores, batch_sizes, params, *,
                 time_block=8, batch_block=None):
    """inputs: (T, B, D) f32; att_scores: (T, B) f32; batch_sizes: (T,) i32."""
    T, B, D = inputs.shape
    H = params["w_hr"].shape[0]

    # Lane/sublane-friendly padded sizes.
    Dp = _round_up(D, 128)
    Hp = _round_up(H, 128)
    Bp = _round_up(B, 8)
    TT = max(1, min(time_block, T))
    Tp = _round_up(T, TT)
    TB = Bp if batch_block is None else batch_block
    assert Bp % TB == 0 and TB % 8 == 0, "batch block must divide padded batch"

    # --- pad activations (zero padding is exact for the recurrence) ---
    x = jnp.zeros((Tp, Bp, Dp), jnp.float32).at[:T, :B, :D].set(inputs)
    att = jnp.zeros((Tp, Bp, 1), jnp.float32).at[:T, :B, 0].set(att_scores)
    bs = jnp.zeros((Tp,), jnp.int32).at[:T].set(batch_sizes.astype(jnp.int32))

    # --- fused / transposed / padded / bf16 weights ---
    def pad_t(w, rows, cols):      # torch layout (out, in) -> (in_pad, out_pad)
        wt = w.T
        return jnp.zeros((rows, cols), w.dtype).at[:wt.shape[0], :wt.shape[1]].set(wt)

    wi = jnp.concatenate([pad_t(params["w_ir"], Dp, Hp),
                          pad_t(params["w_in"], Dp, Hp)],
                         axis=1).astype(jnp.bfloat16)            # (Dp, 2Hp)
    wh = jnp.concatenate([pad_t(params["w_hr"], Hp, Hp),
                          pad_t(params["w_hn"], Hp, Hp)],
                         axis=1).astype(jnp.bfloat16)            # (Hp, 2Hp)
    b_rn = jnp.concatenate([
        jnp.zeros((Hp,), jnp.float32).at[:H].set(params["b_hh_r"]),
        jnp.zeros((Hp,), jnp.float32).at[:H].set(params["b_hh_n"])])[None, :]

    grid = (Bp // TB, Tp // TT)

    # Explicit VMEM budget (double-buffered activation blocks + resident
    # weights + hx scratch), generous headroom, capped below v7x's 64 MiB.
    est = (2 * TT * TB * (Dp + 1 + Hp) * 4
           + 2 * ((Dp + Hp) * 2 * Hp * 2 + 2 * Hp * 4)
           + TB * Hp * 4)
    vmem_limit = int(min(max(4 * est, 16 * 1024 * 1024), 64 * 1024 * 1024))

    grid_spec = pltpu.PrefetchScalarGridSpec(
        num_scalar_prefetch=1,
        grid=grid,
        in_specs=[
            pl.BlockSpec((TT, TB, Dp), lambda b, t, bs_ref: (t, b, 0)),   # x block
            pl.BlockSpec((TT, TB, 1), lambda b, t, bs_ref: (t, b, 0)),    # att block
            # Constant-index weight/bias blocks (fetched once, kept resident).
            pl.BlockSpec((Dp, 2 * Hp), lambda b, t, bs_ref: (0, 0)),
            pl.BlockSpec((Hp, 2 * Hp), lambda b, t, bs_ref: (0, 0)),
            pl.BlockSpec((1, 2 * Hp), lambda b, t, bs_ref: (0, 0)),
        ],
        out_specs=pl.BlockSpec((TT, TB, Hp), lambda b, t, bs_ref: (t, b, 0)),
        scratch_shapes=[pltpu.VMEM((TB, Hp), jnp.float32)],
    )

    out = pl.pallas_call(
        _agru_kernel,
        out_shape=jax.ShapeDtypeStruct((Tp, Bp, Hp), jnp.float32),
        grid_spec=grid_spec,
        compiler_params=pltpu.CompilerParams(
            # Batch blocks are independent (megacore / v7x dual-TC can shard
            # them); the time recurrence must stay sequential.
            dimension_semantics=("parallel", "arbitrary"),
            vmem_limit_bytes=vmem_limit),
    )(bs, x, att, wi, wh, b_rn)

    return out[:T, :B, :H]


def _reference(inputs, att_scores, batch_sizes, params):
    """Pure-JAX f32 replica of DynamicGRU(AGRU) on the padded layout."""
    T, B, D = inputs.shape
    H = params["w_hr"].shape[0]
    hx = jnp.zeros((B, H), jnp.float32)
    outs = []
    for t in range(T):
        x = inputs[t]
        att = att_scores[t][:, None]
        i_r = x @ params["w_ir"].T + params["b_hh_r"]
        i_n = x @ params["w_in"].T + params["b_hh_n"]
        h_r = hx @ params["w_hr"].T + params["b_hh_r"]
        h_n = hx @ params["w_hn"].T + params["b_hh_n"]
        reset = jax.nn.sigmoid(i_r + h_r)
        new_state = jnp.tanh(i_n + reset * h_n)
        hy = (1.0 - att) * hx + att * new_state
        active = (jnp.arange(B) < batch_sizes[t])[:, None]
        hx = jnp.where(active, hy, hx)
        outs.append(jnp.where(active, hy, 0.0))
    return jnp.stack(outs, axis=0)


if __name__ == "__main__":
    key = jax.random.PRNGKey(0)
    T, B, D, H = 8, 8, 16, 32   # seq len, batch, input_size, hidden_size

    k1, k2, k3, k4, k5, k6, k7, k8 = jax.random.split(key, 8)
    params = {
        "w_ir": jax.random.normal(k1, (H, D), jnp.float32) * 0.1,
        "w_in": jax.random.normal(k2, (H, D), jnp.float32) * 0.1,
        "w_hr": jax.random.normal(k3, (H, H), jnp.float32) * 0.1,
        "w_hn": jax.random.normal(k4, (H, H), jnp.float32) * 0.1,
        # torch zero-inits bias_hh; nonzero values here exercise the
        # "bias_hh added to both gi and gh" quirk of the reference cell.
        "b_hh_r": jax.random.normal(k7, (H,), jnp.float32) * 0.1,
        "b_hh_n": jax.random.normal(k8, (H,), jnp.float32) * 0.1,
    }

    # Packed sequence with lengths sorted descending (enforce_sorted=True).
    lengths = jnp.array([8, 8, 7, 6, 5, 3, 2, 1], jnp.int32)
    batch_sizes = jnp.sum(lengths[None, :] > jnp.arange(T)[:, None],
                          axis=1).astype(jnp.int32)                   # (T,)
    time_idx = jnp.arange(T)[:, None]
    valid = (time_idx < lengths[None, :]).astype(jnp.float32)         # (T, B)

    inputs = jax.random.normal(k5, (T, B, D), jnp.float32) * valid[:, :, None]
    att_scores = jax.nn.sigmoid(jax.random.normal(k6, (T, B), jnp.float32)) * valid

    # time_block=4 -> 2 time blocks: exercises hx persistence across grid steps.
    out = dynamic_agru(inputs, att_scores, batch_sizes, params, time_block=4)
    out = jax.block_until_ready(out)

    ref = _reference(inputs, att_scores, batch_sizes, params)
    err = float(jnp.max(jnp.abs(out - ref)))
    # bf16 MXU operands (f32 accumulation) vs. pure-f32 reference.
    assert jnp.allclose(out, ref, atol=2e-2, rtol=2e-2), f"mismatch, max err {err}"

    print("KERNEL_OK")
</pallas_src>

<mosaic_0001>
module attributes {stable_mosaic.version = 11 : i64} {
  func.func @_agru_kernel(%arg0: i32, %arg1: i32, %arg2: memref<8xi32, #tpu.memory_space<smem>>, %arg3: memref<4x8x128xf32, #tpu.memory_space<vmem>>, %arg4: memref<4x8x1xf32, #tpu.memory_space<vmem>>, %arg5: memref<128x256xbf16, #tpu.memory_space<vmem>>, %arg6: memref<128x256xbf16, #tpu.memory_space<vmem>>, %arg7: memref<1x256xf32, #tpu.memory_space<vmem>>, %arg8: memref<4x8x128xf32, #tpu.memory_space<vmem>>, %arg9: memref<8x128xf32, #tpu.memory_space<vmem>>) attributes {dimension_semantics = [#tpu.dimension_semantics<parallel>, #tpu.dimension_semantics<arbitrary>], iteration_bounds = array<i64: 1, 2>, scalar_prefetch = 1 : i64, scratch_operands = 1 : i64, tpu.core_type = #tpu.core_type<tc>, window_params = [{transform_indices = @transform_0, window_bounds = array<i64: 4, 8, 128>}, {transform_indices = @transform_1, window_bounds = array<i64: 4, 8, 1>}, {pipeline_mode = #tpu.pipeline_mode<synchronous>, transform_indices = @transform_2, window_bounds = array<i64: 128, 256>}, {pipeline_mode = #tpu.pipeline_mode<synchronous>, transform_indices = @transform_3, window_bounds = array<i64: 128, 256>}, {pipeline_mode = #tpu.pipeline_mode<synchronous>, transform_indices = @transform_4, window_bounds = array<i64: 1, 256>}, {transform_indices = @transform_5, window_bounds = array<i64: 4, 8, 128>}]} {
    %c0_i32 = arith.constant 0 : i32
    %0 = arith.cmpi eq, %arg1, %c0_i32 : i32
    %1 = arith.extui %0 : i1 to i32
    %c0_i32_0 = arith.constant 0 : i32
    %2 = arith.cmpi ne, %1, %c0_i32_0 : i32
    scf.if %2 {
      %cst_58 = arith.constant 0.000000e+00 : f32
      %200 = vector.broadcast %cst_58 : f32 to vector<8x128xf32>
      %c0_59 = arith.constant 0 : index
      %c0_60 = arith.constant 0 : index
      %201 = vector.load %arg9[%c0_59, %c0_60] : memref<8x128xf32, #tpu.memory_space<vmem>>, vector<8x128xf32>
      tpu.vector_store %arg9[%c0_59, %c0_60], %200 {strides = array<i32>} : memref<8x128xf32, #tpu.memory_space<vmem>>, vector<8x128xf32>,
    } else {
    }
    %c0 = arith.constant 0 : index
    %c0_1 = arith.constant 0 : index
    %3 = vector.load %arg5[%c0, %c0_1] : memref<128x256xbf16, #tpu.memory_space<vmem>>, vector<128x256xbf16>
    %c0_2 = arith.constant 0 : index
    %c0_3 = arith.constant 0 : index
    %4 = vector.load %arg6[%c0_2, %c0_3] : memref<128x256xbf16, #tpu.memory_space<vmem>>, vector<128x256xbf16>
    %c0_4 = arith.constant 0 : index
    %c0_5 = arith.constant 0 : index
    %5 = vector.load %arg7[%c0_4, %c0_5] : memref<1x256xf32, #tpu.memory_space<vmem>>, vector<1x256xf32>
    %6 = tpu.iota {dimensions = array<i32: 0>} : vector<8x128xi32>
    %c8_i32 = arith.constant 8 : i32
    %7 = arith.muli %arg0, %c8_i32 : i32
    %8 = vector.broadcast %7 : i32 to vector<8x128xi32>
    %9 = arith.addi %6, %8 : vector<8x128xi32>
    %c0_6 = arith.constant 0 : index
    %c0_7 = arith.constant 0 : index
    %10 = vector.load %arg9[%c0_6, %c0_7] : memref<8x128xf32, #tpu.memory_space<vmem>>, vector<8x128xf32>
    %c0_i32_8 = arith.constant 0 : i32
    %c4_i32 = arith.constant 4 : i32
    %11 = arith.muli %arg1, %c4_i32 : i32
    %12 = arith.addi %11, %c0_i32_8 : i32
    %13 = arith.index_cast %c0_i32_8 : i32 to index
    %c0_9 = arith.constant 0 : index
    %c0_10 = arith.constant 0 : index
    %14 = vector.load %arg3[%13, %c0_9, %c0_10] : memref<4x8x128xf32, #tpu.memory_space<vmem>>, vector<1x8x128xf32>
    %15 = vector.shape_cast %14 : vector<1x8x128xf32> to vector<8x128xf32>
    %16 = arith.index_cast %c0_i32_8 : i32 to index
    %c0_11 = arith.constant 0 : index
    %c0_12 = arith.constant 0 : index
    %17 = vector.load %arg4[%16, %c0_11, %c0_12] : memref<4x8x1xf32, #tpu.memory_space<vmem>>, vector<1x8x1xf32>
    %18 = vector.shape_cast %17 : vector<1x8x1xf32> to vector<8x1xf32>
    %19 = arith.truncf %15 : vector<8x128xf32> to vector<8x128xbf16>
    %cst = arith.constant dense<0.000000e+00> : vector<8x256xf32>
    %20 = tpu.matmul %19, %3, %cst {dimension_numbers = #tpu.dot_dimension_numbers<[1], [0], [0], [1], [0, 0, 1, 1], [], []>} : vector<8x128xbf16>, vector<128x256xbf16>, vector<8x256xf32> -> vector<8x256xf32>
    %21 = vector.broadcast %5 : vector<1x256xf32> to vector<8x256xf32>
    %22 = arith.addf %20, %21 : vector<8x256xf32>
    %23 = arith.truncf %10 : vector<8x128xf32> to vector<8x128xbf16>
    %cst_13 = arith.constant dense<0.000000e+00> : vector<8x256xf32>
    %24 = tpu.matmul %23, %4, %cst_13 {dimension_numbers = #tpu.dot_dimension_numbers<[1], [0], [0], [1], [0, 0, 1, 1], [], []>} : vector<8x128xbf16>, vector<128x256xbf16>, vector<8x256xf32> -> vector<8x256xf32>
    %25 = vector.broadcast %5 : vector<1x256xf32> to vector<8x256xf32>
    %26 = arith.addf %24, %25 : vector<8x256xf32>
    %27 = vector.extract_strided_slice %22 {offsets = [0, 0], sizes = [8, 128], strides = [1, 1]} : vector<8x256xf32> to vector<8x128xf32>
    %28 = vector.extract_strided_slice %22 {offsets = [0, 128], sizes = [8, 128], strides = [1, 1]} : vector<8x256xf32> to vector<8x128xf32>
    %29 = vector.extract_strided_slice %26 {offsets = [0, 0], sizes = [8, 128], strides = [1, 1]} : vector<8x256xf32> to vector<8x128xf32>
    %30 = vector.extract_strided_slice %26 {offsets = [0, 128], sizes = [8, 128], strides = [1, 1]} : vector<8x256xf32> to vector<8x128xf32>
    %31 = arith.addf %27, %29 : vector<8x128xf32>
    %32 = arith.negf %31 : vector<8x128xf32>
    %33 = math.exp %32 : vector<8x128xf32>
    %cst_14 = arith.constant 1.000000e+00 : f32
    %34 = vector.broadcast %cst_14 : f32 to vector<8x128xf32>
    %35 = arith.addf %34, %33 : vector<8x128xf32>
    %36 = arith.divf %34, %35 : vector<8x128xf32>
    %37 = arith.mulf %36, %30 : vector<8x128xf32>
    %38 = arith.addf %28, %37 : vector<8x128xf32>
    %39 = math.tanh %38 : vector<8x128xf32>
    %cst_15 = arith.constant 1.000000e+00 : f32
    %40 = vector.broadcast %cst_15 : f32 to vector<8x1xf32>
    %41 = arith.subf %40, %18 : vector<8x1xf32>
    %42 = vector.broadcast %41 : vector<8x1xf32> to vector<8x128xf32>
    %43 = arith.mulf %42, %10 : vector<8x128xf32>
    %44 = vector.broadcast %18 : vector<8x1xf32> to vector<8x128xf32>
    %45 = arith.mulf %44, %39 : vector<8x128xf32>
    %46 = arith.addf %43, %45 : vector<8x128xf32>
    %47 = arith.index_cast %12 : i32 to index
    %48 = memref.load %arg2[%47] : memref<8xi32, #tpu.memory_space<smem>>
    %49 = vector.broadcast %48 : i32 to vector<8x128xi32>
    %50 = arith.cmpi slt, %9, %49 : vector<8x128xi32>
    %cst_16 = arith.constant 0.000000e+00 : f32
    %51 = vector.broadcast %cst_16 : f32 to vector<8x128xf32>
    %52 = arith.select %50, %46, %51 : vector<8x128xi1>, vector<8x128xf32>
    %53 = arith.index_cast %c0_i32_8 : i32 to index
    %c0_17 = arith.constant 0 : index
    %c0_18 = arith.constant 0 : index
    %54 = vector.load %arg8[%53, %c0_17, %c0_18] : memref<4x8x128xf32, #tpu.memory_space<vmem>>, vector<1x8x128xf32>
    %55 = vector.shape_cast %54 : vector<1x8x128xf32> to vector<8x128xf32>
    %56 = vector.shape_cast %52 : vector<8x128xf32> to vector<1x8x128xf32>
    tpu.vector_store %arg8[%53, %c0_17, %c0_18], %56 {strides = array<i32>} : memref<4x8x128xf32, #tpu.memory_space<vmem>>, vector<1x8x128xf32>,
    %57 = arith.select %50, %46, %10 : vector<8x128xi1>, vector<8x128xf32>
    %c1_i32 = arith.constant 1 : i32
    %c4_i32_19 = arith.constant 4 : i32
    %58 = arith.muli %arg1, %c4_i32_19 : i32
    %59 = arith.addi %58, %c1_i32 : i32
    %60 = arith.index_cast %c1_i32 : i32 to index
    %c0_20 = arith.constant 0 : index
    %c0_21 = arith.constant 0 : index
    %61 = vector.load %arg3[%60, %c0_20, %c0_21] : memref<4x8x128xf32, #tpu.memory_space<vmem>>, vector<1x8x128xf32>
    %62 = vector.shape_cast %61 : vector<1x8x128xf32> to vector<8x128xf32>
    %63 = arith.index_cast %c1_i32 : i32 to index
    %c0_22 = arith.constant 0 : index
    %c0_23 = arith.constant 0 : index
    %64 = vector.load %arg4[%63, %c0_22, %c0_23] : memref<4x8x1xf32, #tpu.memory_space<vmem>>, vector<1x8x1xf32>
    %65 = vector.shape_cast %64 : vector<1x8x1xf32> to vector<8x1xf32>
    %66 = arith.truncf %62 : vector<8x128xf32> to vector<8x128xbf16>
    %cst_24 = arith.constant dense<0.000000e+00> : vector<8x256xf32>
    %67 = tpu.matmul %66, %3, %cst_24 {dimension_numbers = #tpu.dot_dimension_numbers<[1], [0], [0], [1], [0, 0, 1, 1], [], []>} : vector<8x128xbf16>, vector<128x256xbf16>, vector<8x256xf32> -> vector<8x256xf32>
    %68 = vector.broadcast %5 : vector<1x256xf32> to vector<8x256xf32>
    %69 = arith.addf %67, %68 : vector<8x256xf32>
    %70 = arith.truncf %57 : vector<8x128xf32> to vector<8x128xbf16>
    %cst_25 = arith.constant dense<0.000000e+00> : vector<8x256xf32>
    %71 = tpu.matmul %70, %4, %cst_25 {dimension_numbers = #tpu.dot_dimension_numbers<[1], [0], [0], [1], [0, 0, 1, 1], [], []>} : vector<8x128xbf16>, vector<128x256xbf16>, vector<8x256xf32> -> vector<8x256xf32>
    %72 = vector.broadcast %5 : vector<1x256xf32> to vector<8x256xf32>
    %73 = arith.addf %71, %72 : vector<8x256xf32>
    %74 = vector.extract_strided_slice %69 {offsets = [0, 0], sizes = [8, 128], strides = [1, 1]} : vector<8x256xf32> to vector<8x128xf32>
    %75 = vector.extract_strided_slice %69 {offsets = [0, 128], sizes = [8, 128], strides = [1, 1]} : vector<8x256xf32> to vector<8x128xf32>
    %76 = vector.extract_strided_slice %73 {offsets = [0, 0], sizes = [8, 128], strides = [1, 1]} : vector<8x256xf32> to vector<8x128xf32>
    %77 = vector.extract_strided_slice %73 {offsets = [0, 128], sizes = [8, 128], strides = [1, 1]} : vector<8x256xf32> to vector<8x128xf32>
    %78 = arith.addf %74, %76 : vector<8x128xf32>
    %79 = arith.negf %78 : vector<8x128xf32>
    %80 = math.exp %79 : vector<8x128xf32>
    %cst_26 = arith.constant 1.000000e+00 : f32
    %81 = vector.broadcast %cst_26 : f32 to vector<8x128xf32>
    %82 = arith.addf %81, %80 : vector<8x128xf32>
    %83 = arith.divf %81, %82 : vector<8x128xf32>
    %84 = arith.mulf %83, %77 : vector<8x128xf32>
    %85 = arith.addf %75, %84 : vector<8x128xf32>
    %86 = math.tanh %85 : vector<8x128xf32>
    %cst_27 = arith.constant 1.000000e+00 : f32
    %87 = vector.broadcast %cst_27 : f32 to vector<8x1xf32>
    %88 = arith.subf %87, %65 : vector<8x1xf32>
    %89 = vector.broadcast %88 : vector<8x1xf32> to vector<8x128xf32>
    %90 = arith.mulf %89, %57 : vector<8x128xf32>
    %91 = vector.broadcast %65 : vector<8x1xf32> to vector<8x128xf32>
    %92 = arith.mulf %91, %86 : vector<8x128xf32>
    %93 = arith.addf %90, %92 : vector<8x128xf32>
    %94 = arith.index_cast %59 : i32 to index
    %95 = memref.load %arg2[%94] : memref<8xi32, #tpu.memory_space<smem>>
    %96 = vector.broadcast %95 : i32 to vector<8x128xi32>
    %97 = arith.cmpi slt, %9, %96 : vector<8x128xi32>
    %cst_28 = arith.constant 0.000000e+00 : f32
    %98 = vector.broadcast %cst_28 : f32 to vector<8x128xf32>
    %99 = arith.select %97, %93, %98 : vector<8x128xi1>, vector<8x128xf32>
    %100 = arith.index_cast %c1_i32 : i32 to index
    %c0_29 = arith.constant 0 : index
    %c0_30 = arith.constant 0 : index
    %101 = vector.load %arg8[%100, %c0_29, %c0_30] : memref<4x8x128xf32, #tpu.memory_space<vmem>>, vector<1x8x128xf32>
    %102 = vector.shape_cast %101 : vector<1x8x128xf32> to vector<8x128xf32>
    %103 = vector.shape_cast %99 : vector<8x128xf32> to vector<1x8x128xf32>
    tpu.vector_store %arg8[%100, %c0_29, %c0_30], %103 {strides = array<i32>} : memref<4x8x128xf32, #tpu.memory_space<vmem>>, vector<1x8x128xf32>,
    %104 = arith.select %97, %93, %57 : vector<8x128xi1>, vector<8x128xf32>
    %c2_i32 = arith.constant 2 : i32
    %c4_i32_31 = arith.constant 4 : i32
    %105 = arith.muli %arg1, %c4_i32_31 : i32
    %106 = arith.addi %105, %c2_i32 : i32
    %107 = arith.index_cast %c2_i32 : i32 to index
    %c0_32 = arith.constant 0 : index
    %c0_33 = arith.constant 0 : index
    %108 = vector.load %arg3[%107, %c0_32, %c0_33] : memref<4x8x128xf32, #tpu.memory_space<vmem>>, vector<1x8x128xf32>
    %109 = vector.shape_cast %108 : vector<1x8x128xf32> to vector<8x128xf32>
    %110 = arith.index_cast %c2_i32 : i32 to index
    %c0_34 = arith.constant 0 : index
    %c0_35 = arith.constant 0 : index
    %111 = vector.load %arg4[%110, %c0_34, %c0_35] : memref<4x8x1xf32, #tpu.memory_space<vmem>>, vector<1x8x1xf32>
    %112 = vector.shape_cast %111 : vector<1x8x1xf32> to vector<8x1xf32>
    %113 = arith.truncf %109 : vector<8x128xf32> to vector<8x128xbf16>
    %cst_36 = arith.constant dense<0.000000e+00> : vector<8x256xf32>
    %114 = tpu.matmul %113, %3, %cst_36 {dimension_numbers = #tpu.dot_dimension_numbers<[1], [0], [0], [1], [0, 0, 1, 1], [], []>} : vector<8x128xbf16>, vector<128x256xbf16>, vector<8x256xf32> -> vector<8x256xf32>
    %115 = vector.broadcast %5 : vector<1x256xf32> to vector<8x256xf32>
    %116 = arith.addf %114, %115 : vector<8x256xf32>
    %117 = arith.truncf %104 : vector<8x128xf32> to vector<8x128xbf16>
    %cst_37 = arith.constant dense<0.000000e+00> : vector<8x256xf32>
    %118 = tpu.matmul %117, %4, %cst_37 {dimension_numbers = #tpu.dot_dimension_numbers<[1], [0], [0], [1], [0, 0, 1, 1], [], []>} : vector<8x128xbf16>, vector<128x256xbf16>, vector<8x256xf32> -> vector<8x256xf32>
    %119 = vector.broadcast %5 : vector<1x256xf32> to vector<8x256xf32>
    %120 = arith.addf %118, %119 : vector<8x256xf32>
    %121 = vector.extract_strided_slice %116 {offsets = [0, 0], sizes = [8, 128], strides = [1, 1]} : vector<8x256xf32> to vector<8x128xf32>
    %122 = vector.extract_strided_slice %116 {offsets = [0, 128], sizes = [8, 128], strides = [1, 1]} : vector<8x256xf32> to vector<8x128xf32>
    %123 = vector.extract_strided_slice %120 {offsets = [0, 0], sizes = [8, 128], strides = [1, 1]} : vector<8x256xf32> to vector<8x128xf32>
    %124 = vector.extract_strided_slice %120 {offsets = [0, 128], sizes = [8, 128], strides = [1, 1]} : vector<8x256xf32> to vector<8x128xf32>
    %125 = arith.addf %121, %123 : vector<8x128xf32>
    %126 = arith.negf %125 : vector<8x128xf32>
    %127 = math.exp %126 : vector<8x128xf32>
    %cst_38 = arith.constant 1.000000e+00 : f32
    %128 = vector.broadcast %cst_38 : f32 to vector<8x128xf32>
    %129 = arith.addf %128, %127 : vector<8x128xf32>
    %130 = arith.divf %128, %129 : vector<8x128xf32>
    %131 = arith.mulf %130, %124 : vector<8x128xf32>
    %132 = arith.addf %122, %131 : vector<8x128xf32>
    %133 = math.tanh %132 : vector<8x128xf32>
    %cst_39 = arith.constant 1.000000e+00 : f32
    %134 = vector.broadcast %cst_39 : f32 to vector<8x1xf32>
    %135 = arith.subf %134, %112 : vector<8x1xf32>
    %136 = vector.broadcast %135 : vector<8x1xf32> to vector<8x128xf32>
    %137 = arith.mulf %136, %104 : vector<8x128xf32>
    %138 = vector.broadcast %112 : vector<8x1xf32> to vector<8x128xf32>
    %139 = arith.mulf %138, %133 : vector<8x128xf32>
    %140 = arith.addf %137, %139 : vector<8x128xf32>
    %141 = arith.index_cast %106 : i32 to index
    %142 = memref.load %arg2[%141] : memref<8xi32, #tpu.memory_space<smem>>
    %143 = vector.broadcast %142 : i32 to vector<8x128xi32>
    %144 = arith.cmpi slt, %9, %143 : vector<8x128xi32>
    %cst_40 = arith.constant 0.000000e+00 : f32
    %145 = vector.broadcast %cst_40 : f32 to vector<8x128xf32>
    %146 = arith.select %144, %140, %145 : vector<8x128xi1>, vector<8x128xf32>
    %147 = arith.index_cast %c2_i32 : i32 to index
    %c0_41 = arith.constant 0 : index
    %c0_42 = arith.constant 0 : index
    %148 = vector.load %arg8[%147, %c0_41, %c0_42] : memref<4x8x128xf32, #tpu.memory_space<vmem>>, vector<1x8x128xf32>
    %149 = vector.shape_cast %148 : vector<1x8x128xf32> to vector<8x128xf32>
    %150 = vector.shape_cast %146 : vector<8x128xf32> to vector<1x8x128xf32>
    tpu.vector_store %arg8[%147, %c0_41, %c0_42], %150 {strides = array<i32>} : memref<4x8x128xf32, #tpu.memory_space<vmem>>, vector<1x8x128xf32>,
    %151 = arith.select %144, %140, %104 : vector<8x128xi1>, vector<8x128xf32>
    %c3_i32 = arith.constant 3 : i32
    %c4_i32_43 = arith.constant 4 : i32
    %152 = arith.muli %arg1, %c4_i32_43 : i32
    %153 = arith.addi %152, %c3_i32 : i32
    %154 = arith.index_cast %c3_i32 : i32 to index
    %c0_44 = arith.constant 0 : index
    %c0_45 = arith.constant 0 : index
    %155 = vector.load %arg3[%154, %c0_44, %c0_45] : memref<4x8x128xf32, #tpu.memory_space<vmem>>, vector<1x8x128xf32>
    %156 = vector.shape_cast %155 : vector<1x8x128xf32> to vector<8x128xf32>
    %157 = arith.index_cast %c3_i32 : i32 to index
    %c0_46 = arith.constant 0 : index
    %c0_47 = arith.constant 0 : index
    %158 = vector.load %arg4[%157, %c0_46, %c0_47] : memref<4x8x1xf32, #tpu.memory_space<vmem>>, vector<1x8x1xf32>
    %159 = vector.shape_cast %158 : vector<1x8x1xf32> to vector<8x1xf32>
    %160 = arith.truncf %156 : vector<8x128xf32> to vector<8x128xbf16>
    %cst_48 = arith.constant dense<0.000000e+00> : vector<8x256xf32>
    %161 = tpu.matmul %160, %3, %cst_48 {dimension_numbers = #tpu.dot_dimension_numbers<[1], [0], [0], [1], [0, 0, 1, 1], [], []>} : vector<8x128xbf16>, vector<128x256xbf16>, vector<8x256xf32> -> vector<8x256xf32>
    %162 = vector.broadcast %5 : vector<1x256xf32> to vector<8x256xf32>
    %163 = arith.addf %161, %162 : vector<8x256xf32>
    %164 = arith.truncf %151 : vector<8x128xf32> to vector<8x128xbf16>
    %cst_49 = arith.constant dense<0.000000e+00> : vector<8x256xf32>
    %165 = tpu.matmul %164, %4, %cst_49 {dimension_numbers = #tpu.dot_dimension_numbers<[1], [0], [0], [1], [0, 0, 1, 1], [], []>} : vector<8x128xbf16>, vector<128x256xbf16>, vector<8x256xf32> -> vector<8x256xf32>
    %166 = vector.broadcast %5 : vector<1x256xf32> to vector<8x256xf32>
    %167 = arith.addf %165, %166 : vector<8x256xf32>
    %168 = vector.extract_strided_slice %163 {offsets = [0, 0], sizes = [8, 128], strides = [1, 1]} : vector<8x256xf32> to vector<8x128xf32>
    %169 = vector.extract_strided_slice %163 {offsets = [0, 128], sizes = [8, 128], strides = [1, 1]} : vector<8x256xf32> to vector<8x128xf32>
    %170 = vector.extract_strided_slice %167 {offsets = [0, 0], sizes = [8, 128], strides = [1, 1]} : vector<8x256xf32> to vector<8x128xf32>
    %171 = vector.extract_strided_slice %167 {offsets = [0, 128], sizes = [8, 128], strides = [1, 1]} : vector<8x256xf32> to vector<8x128xf32>
    %172 = arith.addf %168, %170 : vector<8x128xf32>
    %173 = arith.negf %172 : vector<8x128xf32>
    %174 = math.exp %173 : vector<8x128xf32>
    %cst_50 = arith.constant 1.000000e+00 : f32
    %175 = vector.broadcast %cst_50 : f32 to vector<8x128xf32>
    %176 = arith.addf %175, %174 : vector<8x128xf32>
    %177 = arith.divf %175, %176 : vector<8x128xf32>
    %178 = arith.mulf %177, %171 : vector<8x128xf32>
    %179 = arith.addf %169, %178 : vector<8x128xf32>
    %180 = math.tanh %179 : vector<8x128xf32>
    %cst_51 = arith.constant 1.000000e+00 : f32
    %181 = vector.broadcast %cst_51 : f32 to vector<8x1xf32>
    %182 = arith.subf %181, %159 : vector<8x1xf32>
    %183 = vector.broadcast %182 : vector<8x1xf32> to vector<8x128xf32>
    %184 = arith.mulf %183, %151 : vector<8x128xf32>
    %185 = vector.broadcast %159 : vector<8x1xf32> to vector<8x128xf32>
    %186 = arith.mulf %185, %180 : vector<8x128xf32>
    %187 = arith.addf %184, %186 : vector<8x128xf32>
    %188 = arith.index_cast %153 : i32 to index
    %189 = memref.load %arg2[%188] : memref<8xi32, #tpu.memory_space<smem>>
    %190 = vector.broadcast %189 : i32 to vector<8x128xi32>
    %191 = arith.cmpi slt, %9, %190 : vector<8x128xi32>
    %cst_52 = arith.constant 0.000000e+00 : f32
    %192 = vector.broadcast %cst_52 : f32 to vector<8x128xf32>
    %193 = arith.select %191, %187, %192 : vector<8x128xi1>, vector<8x128xf32>
    %194 = arith.index_cast %c3_i32 : i32 to index
    %c0_53 = arith.constant 0 : index
    %c0_54 = arith.constant 0 : index
    %195 = vector.load %arg8[%194, %c0_53, %c0_54] : memref<4x8x128xf32, #tpu.memory_space<vmem>>, vector<1x8x128xf32>
    %196 = vector.shape_cast %195 : vector<1x8x128xf32> to vector<8x128xf32>
    %197 = vector.shape_cast %193 : vector<8x128xf32> to vector<1x8x128xf32>
    tpu.vector_store %arg8[%194, %c0_53, %c0_54], %197 {strides = array<i32>} : memref<4x8x128xf32, #tpu.memory_space<vmem>>, vector<1x8x128xf32>,
    %198 = arith.select %191, %187, %151 : vector<8x128xi1>, vector<8x128xf32>
    %c4_i32_55 = arith.constant 4 : i32
    %c0_56 = arith.constant 0 : index
    %c0_57 = arith.constant 0 : index
    %199 = vector.load %arg9[%c0_56, %c0_57] : memref<8x128xf32, #tpu.memory_space<vmem>>, vector<8x128xf32>
    tpu.vector_store %arg9[%c0_56, %c0_57], %198 {strides = array<i32>} : memref<8x128xf32, #tpu.memory_space<vmem>>, vector<8x128xf32>,
    return
  }
  func.func @transform_0(%arg0: i32, %arg1: i32, %arg2: memref<8xi32, #tpu.memory_space<smem>>) -> (i32, i32, i32) {
    %c0_i32 = arith.constant 0 : i32
    %c0_i32_0 = arith.constant 0 : i32
    return %arg1, %arg0, %c0_i32 : i32, i32, i32
  }
  func.func @transform_1(%arg0: i32, %arg1: i32, %arg2: memref<8xi32, #tpu.memory_space<smem>>) -> (i32, i32, i32) {
    %c0_i32 = arith.constant 0 : i32
    %c0_i32_0 = arith.constant 0 : i32
    return %arg1, %arg0, %c0_i32 : i32, i32, i32
  }
  func.func @transform_2(%arg0: i32, %arg1: i32, %arg2: memref<8xi32, #tpu.memory_space<smem>>) -> (i32, i32) {
    %c0_i32 = arith.constant 0 : i32
    %c0_i32_0 = arith.constant 0 : i32
    %c0_i32_1 = arith.constant 0 : i32
    return %c0_i32, %c0_i32_0 : i32, i32
  }
  func.func @transform_3(%arg0: i32, %arg1: i32, %arg2: memref<8xi32, #tpu.memory_space<smem>>) -> (i32, i32) {
    %c0_i32 = arith.constant 0 : i32
    %c0_i32_0 = arith.constant 0 : i32
    %c0_i32_1 = arith.constant 0 : i32
    return %c0_i32, %c0_i32_0 : i32, i32
  }
  func.func @transform_4(%arg0: i32, %arg1: i32, %arg2: memref<8xi32, #tpu.memory_space<smem>>) -> (i32, i32) {
    %c0_i32 = arith.constant 0 : i32
    %c0_i32_0 = arith.constant 0 : i32
    %c0_i32_1 = arith.constant 0 : i32
    return %c0_i32, %c0_i32_0 : i32, i32
  }
  func.func @transform_5(%arg0: i32, %arg1: i32, %arg2: memref<8xi32, #tpu.memory_space<smem>>) -> (i32, i32, i32) {
    %c0_i32 = arith.constant 0 : i32
    %c0_i32_0 = arith.constant 0 : i32
    return %arg1, %arg0, %c0_i32 : i32, i32, i32
  }
}

</mosaic_0001>

<llo_original>
// kernel: tpu_custom_call.1
$region0: #{tpu_custom_call.1}
  #allocation0 [shape = 'u32[]', space=smem, size = 0x4, offset = 0x4, fixed_abs, tag = 'smem constant byte address 0x4 - core index']
  #allocation1 [shape = 'u32[72,128]{1,0:T(1,128)}', space=vmem, size = 0x9000, scoped, tag = 'internal scratch']
  #allocation2 [shape = 'f32[8,128]{1,0:T(8,128)}', space=vmem, size = 0x1000, scoped, tag = 'scratch operand']
  #allocation3 [shape = 's32[1]{0}', space=sflag, size = 0x4, scoped, tag = 'scoped memory for tpu_custom_call.1']
  #allocation4 [shape = 'u8[512]{0}', space=smem, size = 0x200, scoped, tag = 'prefetched SMEM operand 0']
  %s0 = inlined_call_operand.vmem [shape: s32[8], index: 0, kind: input, shape index: {}]
  %s1 = inlined_call_operand.vmem [shape: f32[8,8,128], index: 1, kind: input, shape index: {}]
  %s2 = inlined_call_operand.vmem [shape: f32[8,8,1], index: 2, kind: input, shape index: {}]
  %s3 = inlined_call_operand.hbm [shape: bf16[128,256], index: 3, kind: input, shape index: {}]
  %s4 = inlined_call_operand.hbm [shape: bf16[128,256], index: 4, kind: input, shape index: {}]
  %s5 = inlined_call_operand.vmem [shape: f32[1,256], index: 5, kind: input, shape index: {}]
  %s6 = inlined_call_operand.hbm [shape: f32[8,8,128], index: 6, kind: output, shape index: {}]
  %s7 = sld [smem:[#allocation0]]
  $region65: #{tpu_custom_call.1} parent=0
    _
  %s9 = ssub.s32 1, %s7
  %s10 = scalar_select 0, %s9, %s7
  %s12 = sshll.u32 %s0, 4
  %s13 = int_to_ptr.vmem [resolvable:$true] %s12
  %15 = dma.vmem_to_smem %s13, 16, [#allocation4], [#allocation3]
  %17 = dma.done [#allocation3], 16
  %18 = sfence
  $region1: #{tpu_custom_call.1} parent=0
    #allocation5 [shape = 'u8[65536]{0}', space=vmem, size = 0x10000, scoped, tag = 'input window, operand 3, single buffered']
    #allocation6 [shape = 's32[2]{0}', space=sflag, size = 0x8, scoped, tag = 'scoped memory for tpu_custom_call.1']
    #allocation7 [shape = 's32[2]{0}', space=sflag, size = 0x8, scoped, tag = 'scoped memory for tpu_custom_call.1']
    #allocation8 [shape = 'u8[65536]{0}', space=vmem, size = 0x10000, scoped, tag = 'input window, operand 4, single buffered']
    #allocation9 [shape = 's32[1]{0}', space=sflag, size = 0x4, scoped, tag = 'scoped memory for tpu_custom_call.1']
    #allocation10 [shape = 'u8[32768]{0}', space=vmem, size = 0x8000, scoped, tag = 'output window, operand 0']
    %19 = vsyncpa [#allocation6], 0
    %20 = vsyncpa [#allocation9], 0
    %21 = vsyncpa [#allocation7], 0
    %s22 = scalar_lea.sflag [#allocation7], 1
    %23 = vsyncpa %s22, 0
    loop: start=0, step=1, limit=4
    $region2: #{tpu_custom_call.1} parent=1 // loop_pre_header
      _
    $region3: #{tpu_custom_call.1} parent=1 // loop_header
      %s25 = sphi 0, %s29
      %p26 = scmp.ge.s32.totalorder %s25, 4
      %s32 = sphi 0, %s44
      %s33 = sphi 0, %s40
      %s34 = sphi 0, %s32
      %s35 = sphi 0, %s33
      %s36 = sphi 0, %s34
      %s37 = sphi 0, %s35
      %s49 = sphi 0, %s51
      %s52 = sphi 0, %s49
      %s53 = sphi 0, %s52
      %s69 = sphi 0, %s53
      %s77 = sphi 0, %s79
      %s80 = sphi 0, %s77
      %s81 = sphi 0, %s80
      %s97 = sphi 0, %s81
      %s101 = sphi 0, %s101
      %s103 = sphi 0, %s101
      %s104 = sphi 0, %s103
      %s118 = sphi 0, %s104
      %s122 = sphi 0, %s122
      %s124 = sphi 0, %s122
      %s125 = sphi 0, %s124
      %s139 = sphi 0, %s125
      %s143 = sphi 0, %s143
      %s145 = sphi 0, %s143
      %s146 = sphi 0, %s145
      %s160 = sphi 0, %s146
      %s168 = sphi 0, %s170
      %s171 = sphi 0, %s168
      %s172 = sphi 0, %s171
      %s188 = sphi 0, %s172
    $region4: #{tpu_custom_call.1} parent=1 // loop_header_branch
      %28 = sbr.rel (%p26) target = $region8
    $region5: #{tpu_custom_call.1} parent=1 // loop_body
      %s30 = ssub.s32 %s25, 1
      %s31 = ssub.s32 %s25, 2
      %s38 = sadd.s32 1, %s33
      %p39 = scmp.ge.s32.totalorder %s38, 2
      %s40 = scalar_select %p39, 0, %s38
      %s41 = sadd.s32 1, %s32
      %s42 = scalar_select %p39, %s41, %s32
      %p43 = scmp.ge.s32.totalorder %s42, 1
      %s44 = scalar_select %p43, 0, %s42
      %s45 = ssub.s32 %s33, %s40
      %s46 = ssub.s32 %s32, %s44
      %s47 = sor.u32 %s45, %s46
      %p48 = scmp.eq.s32.totalorder %s47, 0
      %s50 = sadd.s32 %s49, 1
      %s51 = scalar_select %p48, %s49, %s50
      %p54 = pneg %p48
      %p55 = scmp.eq.s32.totalorder %s25, 1
      %p56 = por %p54, %p55
      %p57 = scmp.ne.s32.totalorder %s49, %s52
      %p58 = scmp.eq.s32.totalorder %s25, 0
      %p59 = por %p57, %p58
      %p60 = scmp.ne.s32.totalorder %s49, %s52
      %p61 = scmp.eq.s32.totalorder %s30, 1
      %p62 = por %p60, %p61
      %p63 = scmp.ne.s32.totalorder %s52, %s53
      %p64 = scmp.eq.s32.totalorder %s30, 0
      %p65 = por %p63, %p64
      %p66 = scmp.ne.s32.totalorder %s52, %s53
      %p67 = scmp.eq.s32.totalorder %s31, 1
      %p68 = por %p66, %p67
      %p70 = scmp.ne.s32.totalorder %s53, %s69
      %p71 = scmp.eq.s32.totalorder %s31, 0
      %p72 = por %p70, %p71
      %s73 = ssub.s32 %s33, %s40
      %s74 = ssub.s32 %s32, %s44
      %s75 = sor.u32 %s73, %s74
      %p76 = scmp.eq.s32.totalorder %s75, 0
      %s78 = sadd.s32 %s77, 1
      %s79 = scalar_select %p76, %s77, %s78
      %p82 = pneg %p76
      %p83 = scmp.eq.s32.totalorder %s25, 1
      %p84 = por %p82, %p83
      %p85 = scmp.ne.s32.totalorder %s77, %s80
      %p86 = scmp.eq.s32.totalorder %s25, 0
      %p87 = por %p85, %p86
      %p88 = scmp.ne.s32.totalorder %s77, %s80
      %p89 = scmp.eq.s32.totalorder %s30, 1
      %p90 = por %p88, %p89
      %p91 = scmp.ne.s32.totalorder %s80, %s81
      %p92 = scmp.eq.s32.totalorder %s30, 0
      %p93 = por %p91, %p92
      %p94 = scmp.ne.s32.totalorder %s80, %s81
      %p95 = scmp.eq.s32.totalorder %s31, 1
      %p96 = por %p94, %p95
      %p98 = scmp.ne.s32.totalorder %s81, %s97
      %p99 = scmp.eq.s32.totalorder %s31, 0
      %p100 = por %p98, %p99
      %s102 = sadd.s32 %s101, 1
      %p105 = scmp.eq.s32.totalorder %s25, 1
      %p106 = scmp.ne.s32.totalorder %s101, %s103
      %p107 = scmp.eq.s32.totalorder %s25, 0
      %p108 = por %p106, %p107
      %p109 = scmp.ne.s32.totalorder %s101, %s103
      %p110 = scmp.eq.s32.totalorder %s30, 1
      %p111 = por %p109, %p110
      %p112 = scmp.ne.s32.totalorder %s103, %s104
      %p113 = scmp.eq.s32.totalorder %s30, 0
      %p114 = por %p112, %p113
      %p115 = scmp.ne.s32.totalorder %s103, %s104
      %p116 = scmp.eq.s32.totalorder %s31, 1
      %p117 = por %p115, %p116
      %p119 = scmp.ne.s32.totalorder %s104, %s118
      %p120 = scmp.eq.s32.totalorder %s31, 0
      %p121 = por %p119, %p120
      %s123 = sadd.s32 %s122, 1
      %p126 = scmp.eq.s32.totalorder %s25, 1
      %p127 = scmp.ne.s32.totalorder %s122, %s124
      %p128 = scmp.eq.s32.totalorder %s25, 0
      %p129 = por %p127, %p128
      %p130 = scmp.ne.s32.totalorder %s122, %s124
      %p131 = scmp.eq.s32.totalorder %s30, 1
      %p132 = por %p130, %p131
      %p133 = scmp.ne.s32.totalorder %s124, %s125
      %p134 = scmp.eq.s32.totalorder %s30, 0
      %p135 = por %p133, %p134
      %p136 = scmp.ne.s32.totalorder %s124, %s125
      %p137 = scmp.eq.s32.totalorder %s31, 1
      %p138 = por %p136, %p137
      %p140 = scmp.ne.s32.totalorder %s125, %s139
      %p141 = scmp.eq.s32.totalorder %s31, 0
      %p142 = por %p140, %p141
      %s144 = sadd.s32 %s143, 1
      %p147 = scmp.eq.s32.totalorder %s25, 1
      %p148 = scmp.ne.s32.totalorder %s143, %s145
      %p149 = scmp.eq.s32.totalorder %s25, 0
      %p150 = por %p148, %p149
      %p151 = scmp.ne.s32.totalorder %s143, %s145
      %p152 = scmp.eq.s32.totalorder %s30, 1
      %p153 = por %p151, %p152
      %p154 = scmp.ne.s32.totalorder %s145, %s146
      %p155 = scmp.eq.s32.totalorder %s30, 0
      %p156 = por %p154, %p155
      %p157 = scmp.ne.s32.totalorder %s145, %s146
      %p158 = scmp.eq.s32.totalorder %s31, 1
      %p159 = por %p157, %p158
      %p161 = scmp.ne.s32.totalorder %s146, %s160
      %p162 = scmp.eq.s32.totalorder %s31, 0
      %p163 = por %p161, %p162
      %s164 = ssub.s32 %s33, %s40
      %s165 = ssub.s32 %s32, %s44
      %s166 = sor.u32 %s164, %s165
      %p167 = scmp.eq.s32.totalorder %s166, 0
      %s169 = sadd.s32 %s168, 1
      %s170 = scalar_select %p167, %s168, %s169
      %p173 = pneg %p167
      %p174 = scmp.eq.s32.totalorder %s25, 1
      %p175 = por %p173, %p174
      %p176 = scmp.ne.s32.totalorder %s168, %s171
      %p177 = scmp.eq.s32.totalorder %s25, 0
      %p178 = por %p176, %p177
      %p179 = scmp.ne.s32.totalorder %s168, %s171
      %p180 = scmp.eq.s32.totalorder %s30, 1
      %p181 = por %p179, %p180
      %p182 = scmp.ne.s32.totalorder %s171, %s172
      %p183 = scmp.eq.s32.totalorder %s30, 0
      %p184 = por %p182, %p183
      %p185 = scmp.ne.s32.totalorder %s171, %s172
      %p186 = scmp.eq.s32.totalorder %s31, 1
      %p187 = por %p185, %p186
      %p189 = scmp.ne.s32.totalorder %s172, %s188
      %p190 = scmp.eq.s32.totalorder %s31, 0
      %p191 = por %p189, %p190
      %p192 = scmp.le.s32.totalorder 1, %s25
      %p193 = scmp.lt.s32.totalorder %s25, 3
      %p194 = pnand %p192, %p193
      %p195 = pneg %p194
      // Predicated region
      $region9: #{tpu_custom_call.1} parent=5 // pred_check
        _
      $region10: #{tpu_custom_call.1} parent=5 // pred_check_branch
        %197 = sbr.rel (%p194) target = $region12
      $region11: #{tpu_custom_call.1} parent=5 // pred_region
        %s198 = ssub.s32 %s25, 1
        // Predicated region
        $region13: #{tpu_custom_call.1} parent=11 // pred_check
          %p199 = pneg %p114
        $region14: #{tpu_custom_call.1} parent=11 // pred_check_branch
          %201 = sbr.rel (%p199) target = $region16
        $region15: #{tpu_custom_call.1} parent=11 // pred_region
          %203 = vsyncadd [#allocation6], 0
          %s204 = sshll.u32 %s3, 4
          %s205 = int_to_ptr.hbm [resolvable:$true] %s204
          %s206 = sshll.u32 [#allocation5], 4
          %s207 = int_to_ptr.vmem [resolvable:$true] %s206
          %212 = dma.hbm_to_vmem [thread:$0]  %s205, 2048, %s207, [#allocation6], 128, 128, 8
        $region16: #{tpu_custom_call.1} parent=11 // pred_fallthru
          _
        // Predicated region
        $region17: #{tpu_custom_call.1} parent=11 // pred_check
          %p213 = pneg %p135
        $region18: #{tpu_custom_call.1} parent=11 // pred_check_branch
          %215 = sbr.rel (%p213) target = $region20
        $region19: #{tpu_custom_call.1} parent=11 // pred_region
          %217 = vsyncadd [#allocation9], 0
          %s218 = sshll.u32 %s4, 4
          %s219 = int_to_ptr.hbm [resolvable:$true] %s218
          %s220 = sshll.u32 [#allocation8], 4
          %s221 = int_to_ptr.vmem [resolvable:$true] %s220
          %226 = dma.hbm_to_vmem [thread:$0]  %s219, 2048, %s221, [#allocation9], 128, 128, 8
        $region20: #{tpu_custom_call.1} parent=11 // pred_fallthru
          _
        // Predicated region
        $region21: #{tpu_custom_call.1} parent=11 // pred_check
          %p227 = pneg %p156
        $region22: #{tpu_custom_call.1} parent=11 // pred_check_branch
          %229 = sbr.rel (%p227) target = $region24
        $region23: #{tpu_custom_call.1} parent=11 // pred_region
          _
        $region24: #{tpu_custom_call.1} parent=11 // pred_fallthru
          _
      $region12: #{tpu_custom_call.1} parent=5 // pred_fallthru
        _
      %p230 = scmp.lt.s32.totalorder %s25, 2
      // Predicated region
      $region25: #{tpu_custom_call.1} parent=5 // pred_check
        %p231 = pneg %p230
      $region26: #{tpu_custom_call.1} parent=5 // pred_check_branch
        %233 = sbr.rel (%p231) target = $region28
      $region27: #{tpu_custom_call.1} parent=5 // pred_region
        // Predicated region
        $region29: #{tpu_custom_call.1} parent=27 // pred_check
          %p234 = pneg %p59
        $region30: #{tpu_custom_call.1} parent=27 // pred_check_branch
          %236 = sbr.rel (%p234) target = $region32
        $region31: #{tpu_custom_call.1} parent=27 // pred_region
          %s237 = smul.u32 4, %s33
          %p238 = scmp.lt.s32.totalorder %s237, 7
          %s239 = scalar_select %p238, %s237, 7
          %p240 = scmp.lt.s32.totalorder %s32, 0
          %s241 = scalar_select %p240, %s32, 0
          %s242 = sadd.s32 %s241, %s239
          %s243 = smul.addr %s242, 8
          %s244 = scalar_lea.vmem %s1, %s243
          %s245 = smul.u32 4, %s33
        $region32: #{tpu_custom_call.1} parent=27 // pred_fallthru
          _
        // Predicated region
        $region33: #{tpu_custom_call.1} parent=27 // pred_check
          %p246 = pneg %p87
        $region34: #{tpu_custom_call.1} parent=27 // pred_check_branch
          %248 = sbr.rel (%p246) target = $region36
        $region35: #{tpu_custom_call.1} parent=27 // pred_region
          %s249 = smul.u32 4, %s33
          %p250 = scmp.lt.s32.totalorder %s249, 7
          %s251 = scalar_select %p250, %s249, 7
          %p252 = scmp.lt.s32.totalorder %s32, 0
          %s253 = scalar_select %p252, %s32, 0
          %s254 = sadd.s32 %s253, %s251
          %s255 = smul.addr %s254, 8
          %s256 = scalar_lea.vmem %s2, %s255
          %s257 = smul.u32 4, %s33
        $region36: #{tpu_custom_call.1} parent=27 // pred_fallthru
          _
      $region28: #{tpu_custom_call.1} parent=5 // pred_fallthru
        _
      %p258 = scmp.le.s32.totalorder 1, %s25
      %p259 = scmp.lt.s32.totalorder %s25, 3
      %p260 = pnand %p258, %p259
      %p261 = pneg %p260
      // Predicated region
      $region37: #{tpu_custom_call.1} parent=5 // pred_check
        _
      $region38: #{tpu_custom_call.1} parent=5 // pred_check_branch
        %263 = sbr.rel (%p260) target = $region40
      $region39: #{tpu_custom_call.1} parent=5 // pred_region
        %s264 = ssub.s32 %s25, 1
        // Predicated region
        $region41: #{tpu_custom_call.1} parent=39 // pred_check
          %p265 = pneg %p114
        $region42: #{tpu_custom_call.1} parent=39 // pred_check_branch
          %267 = sbr.rel (%p265) target = $region44
        $region43: #{tpu_custom_call.1} parent=39 // pred_region
          %269 = dma.done [#allocation6], 2048
        $region44: #{tpu_custom_call.1} parent=39 // pred_fallthru
          _
        // Predicated region
        $region45: #{tpu_custom_call.1} parent=39 // pred_check
          %p270 = pneg %p135
        $region46: #{tpu_custom_call.1} parent=39 // pred_check_branch
          %272 = sbr.rel (%p270) target = $region48
        $region47: #{tpu_custom_call.1} parent=39 // pred_region
          %274 = dma.done [#allocation9], 2048
        $region48: #{tpu_custom_call.1} parent=39 // pred_fallthru
          _
        %s275 = smul.u32 4, %s35
        %p276 = scmp.lt.s32.totalorder %s275, 7
        %s277 = scalar_select %p276, %s275, 7
        %p278 = scmp.lt.s32.totalorder %s34, 0
        %s279 = scalar_select %p278, %s34, 0
        %s280 = sadd.s32 %s279, %s277
        %s281 = smul.addr %s280, 8
        %s282 = scalar_lea.vmem %s1, %s281
        %p283 = pneg %p65
        %p284 = pneg %p62
        %s285 = smul.u32 4, %s35
        %p286 = scmp.lt.s32.totalorder %s285, 7
        %s287 = scalar_select %p286, %s285, 7
        %p288 = scmp.lt.s32.totalorder %s34, 0
        %s289 = scalar_select %p288, %s34, 0
        %s290 = sadd.s32 %s289, %s287
        %s291 = smul.addr %s290, 8
        %s292 = scalar_lea.vmem %s2, %s291
        %p293 = pneg %p93
        %p294 = pneg %p90
        %p295 = pneg %p114
        %p296 = pneg %p111
        %p297 = pneg %p135
        %p298 = pneg %p132
        %p299 = pneg %p156
        %p300 = pneg %p153
        %p301 = pneg %p184
        %p302 = pneg %p181
        %s303 = sand.u32 %s171, 1
        %s304 = scalar_lea.sflag [#allocation7], %s303
        %s305 = sand.u32 %s171, 1
        %s306 = smul.addr %s305, 32
        %s307 = scalar_lea.vmem [#allocation10], %s306
        %s308 = smul.u32 4, %s35
        %p309 = scmp.lt.s32.totalorder %s308, 7
        %s310 = scalar_select %p309, %s308, 7
        %p311 = scmp.lt.s32.totalorder %s34, 0
        %s312 = scalar_select %p311, %s34, 0
        %s313 = sadd.s32 %s312, %s310
        %s314 = smul.addr %s313, 8
        %s315 = scalar_lea.vmem %s1, %s314
        %s316 = smul.u32 4, %s35
        %s317 = smul.u32 4, %s35
        %p318 = scmp.lt.s32.totalorder %s317, 7
        %s319 = scalar_select %p318, %s317, 7
        %p320 = scmp.lt.s32.totalorder %s34, 0
        %s321 = scalar_select %p320, %s34, 0
        %s322 = sadd.s32 %s321, %s319
        %s323 = smul.addr %s322, 8
        %s324 = scalar_lea.vmem %s2, %s323
        %s325 = smul.u32 4, %s35
        %s326 = smul.u32 4, %s35
        %p327 = scmp.eq.s32.totalorder %s35, 0
        // Predicated region
        $region49: #{tpu_custom_call.1} parent=39 // pred_check
          %p328 = pneg %p327
        $region50: #{tpu_custom_call.1} parent=39 // pred_check_branch
          %330 = sbr.rel (%p328) target = $region52
        $region51: #{tpu_custom_call.1} parent=39 // pred_region
          %331 = vst [vmem:[#allocation2] sm:$0xff] 0.0
        $region52: #{tpu_custom_call.1} parent=39 // pred_fallthru
          _
        %v332 = vld [vmem:[#allocation5] sm:$0xff]
        %v333 = vld [vmem:[#allocation5 + $0x8] sm:$0xff]
        %v334 = vld [vmem:[#allocation5 + $0x10] sm:$0xff]
        %v335 = vld [vmem:[#allocation5 + $0x18] sm:$0xff]
        %v336 = vld [vmem:[#allocation5 + $0x20] sm:$0xff]
        %v337 = vld [vmem:[#allocation5 + $0x28] sm:$0xff]
        %v338 = vld [vmem:[#allocation5 + $0x30] sm:$0xff]
        %v339 = vld [vmem:[#allocation5 + $0x38] sm:$0xff]
        %v340 = vld [vmem:[#allocation5 + $0x40] sm:$0xff]
        %v341 = vld [vmem:[#allocation5 + $0x48] sm:$0xff]
        %v342 = vld [vmem:[#allocation5 + $0x50] sm:$0xff]
        %v343 = vld [vmem:[#allocation5 + $0x58] sm:$0xff]
        %v344 = vld [vmem:[#allocation5 + $0x60] sm:$0xff]
        %v345 = vld [vmem:[#allocation5 + $0x68] sm:$0xff]
        %v346 = vld [vmem:[#allocation5 + $0x70] sm:$0xff]
        %v347 = vld [vmem:[#allocation5 + $0x78] sm:$0xff]
        %v348 = vld [vmem:[#allocation8] sm:$0xff]
        %v349 = vld [vmem:[#allocation8 + $0x8] sm:$0xff]
        %v350 = vld [vmem:[#allocation8 + $0x10] sm:$0xff]
        %v351 = vld [vmem:[#allocation8 + $0x18] sm:$0xff]
        %v352 = vld [vmem:[#allocation8 + $0x20] sm:$0xff]
        %v353 = vld [vmem:[#allocation8 + $0x28] sm:$0xff]
        %v354 = vld [vmem:[#allocation8 + $0x30] sm:$0xff]
        %v355 = vld [vmem:[#allocation8 + $0x38] sm:$0xff]
        %v356 = vld [vmem:[#allocation8 + $0x40] sm:$0xff]
        %v357 = vld [vmem:[#allocation8 + $0x48] sm:$0xff]
        %v358 = vld [vmem:[#allocation8 + $0x50] sm:$0xff]
        %v359 = vld [vmem:[#allocation8 + $0x58] sm:$0xff]
        %v360 = vld [vmem:[#allocation8 + $0x60] sm:$0xff]
        %v361 = vld [vmem:[#allocation8 + $0x68] sm:$0xff]
        %v362 = vld [vmem:[#allocation8 + $0x70] sm:$0xff]
        %v363 = vld [vmem:[#allocation8 + $0x78] sm:$0xff]
        %v364 = vld [vmem:[%s5] sm:$0x3]
        %v365 = vlaneseq
        %v366 = vshrl.u32 %v365, 7
        %s367 = smul.u32 %s34, 8
        %v368 = vstv %s367
        %v369 = vadd.s32 %v366, %v368
        %v370 = vld [vmem:[#allocation2] sm:$0xff]
        %s371 = smul.u32 %s35, 4
        %v372 = vld [vmem:[%s315] sm:$0xff]
        %v373 = vld [vmem:[%s324] sm:$0xff]
        %v374 = vpack.c.bf16 %v372, %v372
        %v376 = vperm.slane %v364, 0
        %v377 = vperm.slane %v364, 1
        %v396 = vunpack.c.l.b16 %v332
        %v397 = vunpack.c.h.b16 %v332
        %v398 = vunpack.c.l.b16 %v333
        %v399 = vunpack.c.h.b16 %v333
        %v400 = vunpack.c.l.b16 %v334
        %v401 = vunpack.c.h.b16 %v334
        %v402 = vunpack.c.l.b16 %v335
        %v403 = vunpack.c.h.b16 %v335
        %v404 = vunpack.c.l.b16 %v336
        %v405 = vunpack.c.h.b16 %v336
        %v406 = vunpack.c.l.b16 %v337
        %v407 = vunpack.c.h.b16 %v337
        %v408 = vunpack.c.l.b16 %v338
        %v409 = vunpack.c.h.b16 %v338
        %v410 = vunpack.c.l.b16 %v339
        %v411 = vunpack.c.h.b16 %v339
        %v412 = vunpack.c.l.b16 %v340
        %v413 = vunpack.c.h.b16 %v340
        %v414 = vunpack.c.l.b16 %v341
        %v415 = vunpack.c.h.b16 %v341
        %v416 = vunpack.c.l.b16 %v342
        %v417 = vunpack.c.h.b16 %v342
        %v418 = vunpack.c.l.b16 %v343
        %v419 = vunpack.c.h.b16 %v343
        %v420 = vunpack.c.l.b16 %v344
        %v421 = vunpack.c.h.b16 %v344
        %v422 = vunpack.c.l.b16 %v345
        %v423 = vunpack.c.h.b16 %v345
        %v424 = vunpack.c.l.b16 %v346
        %v425 = vunpack.c.h.b16 %v346
        %v426 = vunpack.c.l.b16 %v347
        %v427 = vunpack.c.h.b16 %v347
        %v428 = vpack.c.b16 %v398, %v396
        %v429 = vpack.c.b16 %v399, %v397
        %v430 = vpack.c.b16 %v402, %v400
        %v431 = vpack.c.b16 %v403, %v401
        %v432 = vpack.c.b16 %v406, %v404
        %v433 = vpack.c.b16 %v407, %v405
        %v434 = vpack.c.b16 %v410, %v408
        %v435 = vpack.c.b16 %v411, %v409
        %v436 = vpack.c.b16 %v414, %v412
        %v437 = vpack.c.b16 %v415, %v413
        %v438 = vpack.c.b16 %v418, %v416
        %v439 = vpack.c.b16 %v419, %v417
        %v440 = vpack.c.b16 %v422, %v420
        %v441 = vpack.c.b16 %v423, %v421
        %v442 = vpack.c.b16 %v426, %v424
        %v443 = vpack.c.b16 %v427, %v425
        %460 = vmatpush.bf16.msra.mxu0 %v442
        %461 = vmatpush.bf16.msra.mxu0 %v440
        %462 = vmatpush.bf16.msra.mxu0 %v438
        %463 = vmatpush.bf16.msra.mxu0 %v436
        %464 = vmatpush.bf16.msra.mxu0 %v434
        %465 = vmatpush.bf16.msra.mxu0 %v432
        %466 = vmatpush.bf16.msra.mxu0 %v430
        %467 = vmatpush.bf16.msra.mxu0 %v428
        %468 = vmatmul.bf16.gmra.mxu0 %v374
        %v469 = vpop.f32.mrf.mxu0
        %v470 = vadd.f32 %v376, %v469
        %v471 = vpop.f32.mrf.mxu0
        %472 = vdwg.mxu0
        %473 = vmatpush.bf16.msra.mxu0 %v443
        %474 = vmatpush.bf16.msra.mxu0 %v441
        %475 = vmatpush.bf16.msra.mxu0 %v439
        %476 = vmatpush.bf16.msra.mxu0 %v437
        %477 = vmatpush.bf16.msra.mxu0 %v435
        %478 = vmatpush.bf16.msra.mxu0 %v433
        %479 = vmatpush.bf16.msra.mxu0 %v431
        %480 = vmatpush.bf16.msra.mxu0 %v429
        %481 = vmatmul.bf16.gmra.mxu0 %v374
        %v482 = vpop.f32.mrf.mxu0
        %v483 = vadd.f32 %v377, %v482
        %v484 = vpop.f32.mrf.mxu0
        %485 = vdwg.mxu0
        %v486 = vpack.c.bf16 %v370, %v370
        %v503 = vunpack.c.l.b16 %v348
        %v504 = vunpack.c.h.b16 %v348
        %v505 = vunpack.c.l.b16 %v349
        %v506 = vunpack.c.h.b16 %v349
        %v507 = vunpack.c.l.b16 %v350
        %v508 = vunpack.c.h.b16 %v350
        %v509 = vunpack.c.l.b16 %v351
        %v510 = vunpack.c.h.b16 %v351
        %v511 = vunpack.c.l.b16 %v352
        %v512 = vunpack.c.h.b16 %v352
        %v513 = vunpack.c.l.b16 %v353
        %v514 = vunpack.c.h.b16 %v353
        %v515 = vunpack.c.l.b16 %v354
        %v516 = vunpack.c.h.b16 %v354
        %v517 = vunpack.c.l.b16 %v355
        %v518 = vunpack.c.h.b16 %v355
        %v519 = vunpack.c.l.b16 %v356
        %v520 = vunpack.c.h.b16 %v356
        %v521 = vunpack.c.l.b16 %v357
        %v522 = vunpack.c.h.b16 %v357
        %v523 = vunpack.c.l.b16 %v358
        %v524 = vunpack.c.h.b16 %v358
        %v525 = vunpack.c.l.b16 %v359
        %v526 = vunpack.c.h.b16 %v359
        %v527 = vunpack.c.l.b16 %v360
        %v528 = vunpack.c.h.b16 %v360
        %v529 = vunpack.c.l.b16 %v361
        %v530 = vunpack.c.h.b16 %v361
        %v531 = vunpack.c.l.b16 %v362
        %v532 = vunpack.c.h.b16 %v362
        %v533 = vunpack.c.l.b16 %v363
        %v534 = vunpack.c.h.b16 %v363
        %v535 = vpack.c.b16 %v505, %v503
        %v536 = vpack.c.b16 %v506, %v504
        %v537 = vpack.c.b16 %v509, %v507
        %v538 = vpack.c.b16 %v510, %v508
        %v539 = vpack.c.b16 %v513, %v511
        %v540 = vpack.c.b16 %v514, %v512
        %v541 = vpack.c.b16 %v517, %v515
        %v542 = vpack.c.b16 %v518, %v516
        %v543 = vpack.c.b16 %v521, %v519
        %v544 = vpack.c.b16 %v522, %v520
        %v545 = vpack.c.b16 %v525, %v523
        %v546 = vpack.c.b16 %v526, %v524
        %v547 = vpack.c.b16 %v529, %v527
        %v548 = vpack.c.b16 %v530, %v528
        %v549 = vpack.c.b16 %v533, %v531
        %v550 = vpack.c.b16 %v534, %v532
        %567 = vmatpush.bf16.msra.mxu0 %v549
        %568 = vmatpush.bf16.msra.mxu0 %v547
        %569 = vmatpush.bf16.msra.mxu0 %v545
        %570 = vmatpush.bf16.msra.mxu0 %v543
        %571 = vmatpush.bf16.msra.mxu0 %v541
        %572 = vmatpush.bf16.msra.mxu0 %v539
        %573 = vmatpush.bf16.msra.mxu0 %v537
        %574 = vmatpush.bf16.msra.mxu0 %v535
        %575 = vmatmul.bf16.gmra.mxu0 %v486
        %v576 = vpop.f32.mrf.mxu0
        %v577 = vadd.f32 %v376, %v576
        %v578 = vpop.f32.mrf.mxu0
        %579 = vdwg.mxu0
        %580 = vmatpush.bf16.msra.mxu0 %v550
        %581 = vmatpush.bf16.msra.mxu0 %v548
        %582 = vmatpush.bf16.msra.mxu0 %v546
        %583 = vmatpush.bf16.msra.mxu0 %v544
        %584 = vmatpush.bf16.msra.mxu0 %v542
        %585 = vmatpush.bf16.msra.mxu0 %v540
        %586 = vmatpush.bf16.msra.mxu0 %v538
        %587 = vmatpush.bf16.msra.mxu0 %v536
        %588 = vmatmul.bf16.gmra.mxu0 %v486
        %v589 = vpop.f32.mrf.mxu0
        %v590 = vadd.f32 %v377, %v589
        %v591 = vpop.f32.mrf.mxu0
        %592 = vdwg.mxu0
        %v593 = vadd.f32 %v470, %v577
        %v594 = vxor.u32 %v593, 2147483648
        %v595 = vmul.f32 %v594, 1.442695
        %v596 = vpow.pop %v595
        %v597 = vadd.f32 %v596, 1.0
        %v598 = vrcp.pop %v597
        %v599 = vmul.f32 %v597, %v598
        %v600 = vsub.f32 1.0, %v599
        %v601 = vmul.f32 %v598, %v600
        %v602 = vadd.f32 %v598, %v601
        %vm603 = vweird.f32 %v597
        %vm604 = vweird.f32 %v598
        %vm605 = vmor %vm603, %vm604
        %v606 = vsel %vm605, %v598, %v602
        %v607 = vand.u32 2147483647, %v597
        %vm608 = vcmp.eq.f32.partialorder %v607, 8.507059e+37
        %v609 = vand.u32 %v597, 2147483648
        %v610 = vor.u32 1.1754944e-38, %v609
        %v611 = vsel %vm608, %v610, %v606
        %v612 = vmul.f32 1.0, %v611
        %v613 = vmul.f32 %v612, %v590
        %v614 = vadd.f32 %v483, %v613
        %v615 = vtanh.pop %v614
        %v616 = vsub.f32 1.0, %v373
        %618 = vset.pattern.permute.xlu0 0
        %619 = vperm.xlu0 %618, %v616
        %v620 = vpop.permute.xlu0 %619
        %v622 = vmul.f32 %v620, %v370
        %624 = vset.pattern.permute.xlu0 0
        %625 = vperm.xlu0 %624, %v373
        %v626 = vpop.permute.xlu0 %625
        %v628 = vmul.f32 %v626, %v615
        %v629 = vadd.f32 %v622, %v628
        %s630 = sld [smem:[#allocation4 + %s371]]
        %v631 = vstv %s630
        %vm632 = vcmp.lt.s32.totalorder %v369, %v631
        %v633 = vsel %vm632, %v629, 0.0
        %634 = vst [vmem:[%s307] sm:$0xff] %v633
        %v635 = vsel %vm632, %v629, %v370
        %s636 = sadd.s32 %s371, 1
        %s637 = scalar_lea.vmem %s315, 8
        %v638 = vld [vmem:[%s637] sm:$0xff]
        %s639 = scalar_lea.vmem %s324, 8
        %v640 = vld [vmem:[%s639] sm:$0xff]
        %v641 = vpack.c.bf16 %v638, %v638
        %642 = vmatpush.bf16.msra.mxu0 %v442
        %643 = vmatpush.bf16.msra.mxu0 %v440
        %644 = vmatpush.bf16.msra.mxu0 %v438
        %645 = vmatpush.bf16.msra.mxu0 %v436
        %646 = vmatpush.bf16.msra.mxu0 %v434
        %647 = vmatpush.bf16.msra.mxu0 %v432
        %648 = vmatpush.bf16.msra.mxu0 %v430
        %649 = vmatpush.bf16.msra.mxu0 %v428
        %650 = vmatmul.bf16.gmra.mxu0 %v641
        %v651 = vpop.f32.mrf.mxu0
        %v652 = vadd.f32 %v376, %v651
        %v653 = vpop.f32.mrf.mxu0
        %654 = vdwg.mxu0
        %655 = vmatpush.bf16.msra.mxu0 %v443
        %656 = vmatpush.bf16.msra.mxu0 %v441
        %657 = vmatpush.bf16.msra.mxu0 %v439
        %658 = vmatpush.bf16.msra.mxu0 %v437
        %659 = vmatpush.bf16.msra.mxu0 %v435
        %660 = vmatpush.bf16.msra.mxu0 %v433
        %661 = vmatpush.bf16.msra.mxu0 %v431
        %662 = vmatpush.bf16.msra.mxu0 %v429
        %663 = vmatmul.bf16.gmra.mxu0 %v641
        %v664 = vpop.f32.mrf.mxu0
        %v665 = vadd.f32 %v377, %v664
        %v666 = vpop.f32.mrf.mxu0
        %667 = vdwg.mxu0
        %v668 = vpack.c.bf16 %v635, %v635
        %669 = vmatpush.bf16.msra.mxu0 %v549
        %670 = vmatpush.bf16.msra.mxu0 %v547
        %671 = vmatpush.bf16.msra.mxu0 %v545
        %672 = vmatpush.bf16.msra.mxu0 %v543
        %673 = vmatpush.bf16.msra.mxu0 %v541
        %674 = vmatpush.bf16.msra.mxu0 %v539
        %675 = vmatpush.bf16.msra.mxu0 %v537
        %676 = vmatpush.bf16.msra.mxu0 %v535
        %677 = vmatmul.bf16.gmra.mxu0 %v668
        %v678 = vpop.f32.mrf.mxu0
        %v679 = vadd.f32 %v376, %v678
        %v680 = vpop.f32.mrf.mxu0
        %681 = vdwg.mxu0
        %682 = vmatpush.bf16.msra.mxu0 %v550
        %683 = vmatpush.bf16.msra.mxu0 %v548
        %684 = vmatpush.bf16.msra.mxu0 %v546
        %685 = vmatpush.bf16.msra.mxu0 %v544
        %686 = vmatpush.bf16.msra.mxu0 %v542
        %687 = vmatpush.bf16.msra.mxu0 %v540
        %688 = vmatpush.bf16.msra.mxu0 %v538
        %689 = vmatpush.bf16.msra.mxu0 %v536
        %690 = vmatmul.bf16.gmra.mxu0 %v668
        %v691 = vpop.f32.mrf.mxu0
        %v692 = vadd.f32 %v377, %v691
        %v693 = vpop.f32.mrf.mxu0
        %694 = vdwg.mxu0
        %v695 = vadd.f32 %v652, %v679
        %v696 = vxor.u32 %v695, 2147483648
        %v697 = vmul.f32 %v696, 1.442695
        %v698 = vpow.pop %v697
        %v699 = vadd.f32 %v698, 1.0
        %v700 = vrcp.pop %v699
        %v701 = vmul.f32 %v699, %v700
        %v702 = vsub.f32 1.0, %v701
        %v703 = vmul.f32 %v700, %v702
        %v704 = vadd.f32 %v700, %v703
        %vm705 = vweird.f32 %v699
        %vm706 = vweird.f32 %v700
        %vm707 = vmor %vm705, %vm706
        %v708 = vsel %vm707, %v700, %v704
        %v709 = vand.u32 2147483647, %v699
        %vm710 = vcmp.eq.f32.partialorder %v709, 8.507059e+37
        %v711 = vand.u32 %v699, 2147483648
        %v712 = vor.u32 1.1754944e-38, %v711
        %v713 = vsel %vm710, %v712, %v708
        %v714 = vmul.f32 1.0, %v713
        %v715 = vmul.f32 %v714, %v692
        %v716 = vadd.f32 %v665, %v715
        %v717 = vtanh.pop %v716
        %v718 = vsub.f32 1.0, %v640
        %720 = vset.pattern.permute.xlu0 0
        %721 = vperm.xlu0 %720, %v718
        %v722 = vpop.permute.xlu0 %721
        %v724 = vmul.f32 %v722, %v635
        %726 = vset.pattern.permute.xlu0 0
        %727 = vperm.xlu0 %726, %v640
        %v728 = vpop.permute.xlu0 %727
        %v730 = vmul.f32 %v728, %v717
        %v731 = vadd.f32 %v724, %v730
        %s732 = sld [smem:[#allocation4 + %s636]]
        %v733 = vstv %s732
        %vm734 = vcmp.lt.s32.totalorder %v369, %v733
        %v735 = vsel %vm734, %v731, 0.0
        %s736 = scalar_lea.vmem %s307, 8 [#allocation10]
        %737 = vst [vmem:[%s736] sm:$0xff] %v735
        %v738 = vsel %vm734, %v731, %v635
        %s739 = sadd.s32 %s371, 2
        %s740 = scalar_lea.vmem %s315, 16
        %v741 = vld [vmem:[%s740] sm:$0xff]
        %s742 = scalar_lea.vmem %s324, 16
        %v743 = vld [vmem:[%s742] sm:$0xff]
        %v744 = vpack.c.bf16 %v741, %v741
        %745 = vmatpush.bf16.msra.mxu0 %v442
        %746 = vmatpush.bf16.msra.mxu0 %v440
        %747 = vmatpush.bf16.msra.mxu0 %v438
        %748 = vmatpush.bf16.msra.mxu0 %v436
        %749 = vmatpush.bf16.msra.mxu0 %v434
        %750 = vmatpush.bf16.msra.mxu0 %v432
        %751 = vmatpush.bf16.msra.mxu0 %v430
        %752 = vmatpush.bf16.msra.mxu0 %v428
        %753 = vmatmul.bf16.gmra.mxu0 %v744
        %v754 = vpop.f32.mrf.mxu0
        %v755 = vadd.f32 %v376, %v754
        %v756 = vpop.f32.mrf.mxu0
        %757 = vdwg.mxu0
        %758 = vmatpush.bf16.msra.mxu0 %v443
        %759 = vmatpush.bf16.msra.mxu0 %v441
        %760 = vmatpush.bf16.msra.mxu0 %v439
        %761 = vmatpush.bf16.msra.mxu0 %v437
        %762 = vmatpush.bf16.msra.mxu0 %v435
        %763 = vmatpush.bf16.msra.mxu0 %v433
        %764 = vmatpush.bf16.msra.mxu0 %v431
        %765 = vmatpush.bf16.msra.mxu0 %v429
        %766 = vmatmul.bf16.gmra.mxu0 %v744
        %v767 = vpop.f32.mrf.mxu0
        %v768 = vadd.f32 %v377, %v767
        %v769 = vpop.f32.mrf.mxu0
        %770 = vdwg.mxu0
        %v771 = vpack.c.bf16 %v738, %v738
        %772 = vmatpush.bf16.msra.mxu0 %v549
        %773 = vmatpush.bf16.msra.mxu0 %v547
        %774 = vmatpush.bf16.msra.mxu0 %v545
        %775 = vmatpush.bf16.msra.mxu0 %v543
        %776 = vmatpush.bf16.msra.mxu0 %v541
        %777 = vmatpush.bf16.msra.mxu0 %v539
        %778 = vmatpush.bf16.msra.mxu0 %v537
        %779 = vmatpush.bf16.msra.mxu0 %v535
        %780 = vmatmul.bf16.gmra.mxu0 %v771
        %v781 = vpop.f32.mrf.mxu0
        %v782 = vadd.f32 %v376, %v781
        %v783 = vpop.f32.mrf.mxu0
        %784 = vdwg.mxu0
        %785 = vmatpush.bf16.msra.mxu0 %v550
        %786 = vmatpush.bf16.msra.mxu0 %v548
        %787 = vmatpush.bf16.msra.mxu0 %v546
        %788 = vmatpush.bf16.msra.mxu0 %v544
        %789 = vmatpush.bf16.msra.mxu0 %v542
        %790 = vmatpush.bf16.msra.mxu0 %v540
        %791 = vmatpush.bf16.msra.mxu0 %v538
        %792 = vmatpush.bf16.msra.mxu0 %v536
        %793 = vmatmul.bf16.gmra.mxu0 %v771
        %v794 = vpop.f32.mrf.mxu0
        %v795 = vadd.f32 %v377, %v794
        %v796 = vpop.f32.mrf.mxu0
        %797 = vdwg.mxu0
        %v798 = vadd.f32 %v755, %v782
        %v799 = vxor.u32 %v798, 2147483648
        %v800 = vmul.f32 %v799, 1.442695
        %v801 = vpow.pop %v800
        %v802 = vadd.f32 %v801, 1.0
        %v803 = vrcp.pop %v802
        %v804 = vmul.f32 %v802, %v803
        %v805 = vsub.f32 1.0, %v804
        %v806 = vmul.f32 %v803, %v805
        %v807 = vadd.f32 %v803, %v806
        %vm808 = vweird.f32 %v802
        %vm809 = vweird.f32 %v803
        %vm810 = vmor %vm808, %vm809
        %v811 = vsel %vm810, %v803, %v807
        %v812 = vand.u32 2147483647, %v802
        %vm813 = vcmp.eq.f32.partialorder %v812, 8.507059e+37
        %v814 = vand.u32 %v802, 2147483648
        %v815 = vor.u32 1.1754944e-38, %v814
        %v816 = vsel %vm813, %v815, %v811
        %v817 = vmul.f32 1.0, %v816
        %v818 = vmul.f32 %v817, %v795
        %v819 = vadd.f32 %v768, %v818
        %v820 = vtanh.pop %v819
        %v821 = vsub.f32 1.0, %v743
        %823 = vset.pattern.permute.xlu0 0
        %824 = vperm.xlu0 %823, %v821
        %v825 = vpop.permute.xlu0 %824
        %v827 = vmul.f32 %v825, %v738
        %829 = vset.pattern.permute.xlu0 0
        %830 = vperm.xlu0 %829, %v743
        %v831 = vpop.permute.xlu0 %830
        %v833 = vmul.f32 %v831, %v820
        %v834 = vadd.f32 %v827, %v833
        %s835 = sld [smem:[#allocation4 + %s739]]
        %v836 = vstv %s835
        %vm837 = vcmp.lt.s32.totalorder %v369, %v836
        %v838 = vsel %vm837, %v834, 0.0
        %s839 = scalar_lea.vmem %s307, 16 [#allocation10]
        %840 = vst [vmem:[%s839] sm:$0xff] %v838
        %v841 = vsel %vm837, %v834, %v738
        %s842 = sadd.s32 %s371, 3
        %s843 = scalar_lea.vmem %s315, 24
        %v844 = vld [vmem:[%s843] sm:$0xff]
        %s845 = scalar_lea.vmem %s324, 24
        %v846 = vld [vmem:[%s845] sm:$0xff]
        %v847 = vpack.c.bf16 %v844, %v844
        %848 = vmatpush.bf16.msra.mxu0 %v442
        %849 = vmatpush.bf16.msra.mxu0 %v440
        %850 = vmatpush.bf16.msra.mxu0 %v438
        %851 = vmatpush.bf16.msra.mxu0 %v436
        %852 = vmatpush.bf16.msra.mxu0 %v434
        %853 = vmatpush.bf16.msra.mxu0 %v432
        %854 = vmatpush.bf16.msra.mxu0 %v430
        %855 = vmatpush.bf16.msra.mxu0 %v428
        %856 = vmatmul.bf16.gmra.mxu0 %v847
        %v857 = vpop.f32.mrf.mxu0
        %v858 = vadd.f32 %v376, %v857
        %v859 = vpop.f32.mrf.mxu0
        %860 = vdwg.mxu0
        %861 = vmatpush.bf16.msra.mxu0 %v443
        %862 = vmatpush.bf16.msra.mxu0 %v441
        %863 = vmatpush.bf16.msra.mxu0 %v439
        %864 = vmatpush.bf16.msra.mxu0 %v437
        %865 = vmatpush.bf16.msra.mxu0 %v435
        %866 = vmatpush.bf16.msra.mxu0 %v433
        %867 = vmatpush.bf16.msra.mxu0 %v431
        %868 = vmatpush.bf16.msra.mxu0 %v429
        %869 = vmatmul.bf16.gmra.mxu0 %v847
        %v870 = vpop.f32.mrf.mxu0
        %v871 = vadd.f32 %v377, %v870
        %v872 = vpop.f32.mrf.mxu0
        %873 = vdwg.mxu0
        %v874 = vpack.c.bf16 %v841, %v841
        %875 = vmatpush.bf16.msra.mxu0 %v549
        %876 = vmatpush.bf16.msra.mxu0 %v547
        %877 = vmatpush.bf16.msra.mxu0 %v545
        %878 = vmatpush.bf16.msra.mxu0 %v543
        %879 = vmatpush.bf16.msra.mxu0 %v541
        %880 = vmatpush.bf16.msra.mxu0 %v539
        %881 = vmatpush.bf16.msra.mxu0 %v537
        %882 = vmatpush.bf16.msra.mxu0 %v535
        %883 = vmatmul.bf16.gmra.mxu0 %v874
        %v884 = vpop.f32.mrf.mxu0
        %v885 = vadd.f32 %v376, %v884
        %v886 = vpop.f32.mrf.mxu0
        %887 = vdwg.mxu0
        %888 = vmatpush.bf16.msra.mxu0 %v550
        %889 = vmatpush.bf16.msra.mxu0 %v548
        %890 = vmatpush.bf16.msra.mxu0 %v546
        %891 = vmatpush.bf16.msra.mxu0 %v544
        %892 = vmatpush.bf16.msra.mxu0 %v542
        %893 = vmatpush.bf16.msra.mxu0 %v540
        %894 = vmatpush.bf16.msra.mxu0 %v538
        %895 = vmatpush.bf16.msra.mxu0 %v536
        %896 = vmatmul.bf16.gmra.mxu0 %v874
        %v897 = vpop.f32.mrf.mxu0
        %v898 = vadd.f32 %v377, %v897
        %v899 = vpop.f32.mrf.mxu0
        %900 = vdwg.mxu0
        %v901 = vadd.f32 %v858, %v885
        %v902 = vxor.u32 %v901, 2147483648
        %v903 = vmul.f32 %v902, 1.442695
        %v904 = vpow.pop %v903
        %v905 = vadd.f32 %v904, 1.0
        %v906 = vrcp.pop %v905
        %v907 = vmul.f32 %v905, %v906
        %v908 = vsub.f32 1.0, %v907
        %v909 = vmul.f32 %v906, %v908
        %v910 = vadd.f32 %v906, %v909
        %vm911 = vweird.f32 %v905
        %vm912 = vweird.f32 %v906
        %vm913 = vmor %vm911, %vm912
        %v914 = vsel %vm913, %v906, %v910
        %v915 = vand.u32 2147483647, %v905
        %vm916 = vcmp.eq.f32.partialorder %v915, 8.507059e+37
        %v917 = vand.u32 %v905, 2147483648
        %v918 = vor.u32 1.1754944e-38, %v917
        %v919 = vsel %vm916, %v918, %v914
        %v920 = vmul.f32 1.0, %v919
        %v921 = vmul.f32 %v920, %v898
        %v922 = vadd.f32 %v871, %v921
        %v923 = vtanh.pop %v922
        %v924 = vsub.f32 1.0, %v846
        %926 = vset.pattern.permute.xlu0 0
        %927 = vperm.xlu0 %926, %v924
        %v928 = vpop.permute.xlu0 %927
        %v930 = vmul.f32 %v928, %v841
        %932 = vset.pattern.permute.xlu0 0
        %933 = vperm.xlu0 %932, %v846
        %v934 = vpop.permute.xlu0 %933
        %v936 = vmul.f32 %v934, %v923
        %v937 = vadd.f32 %v930, %v936
        %s938 = sld [smem:[#allocation4 + %s842]]
        %v939 = vstv %s938
        %vm940 = vcmp.lt.s32.totalorder %v369, %v939
        %v941 = vsel %vm940, %v937, 0.0
        %s942 = scalar_lea.vmem %s307, 24 [#allocation10]
        %943 = vst [vmem:[%s942] sm:$0xff] %v941
        %v944 = vsel %vm940, %v937, %v841
        %945 = vst [vmem:[#allocation2] sm:$0xff] %v944
        %s946 = sand.u32 %s171, 1
        %s947 = scalar_lea.sflag [#allocation7], %s946
        %s948 = sand.u32 %s171, 1
        %s949 = smul.addr %s948, 32
        %s950 = scalar_lea.vmem [#allocation10], %s949
        // Predicated region
        $region53: #{tpu_custom_call.1} parent=39 // pred_check
          %p951 = pneg %p181
        $region54: #{tpu_custom_call.1} parent=39 // pred_check_branch
          %953 = sbr.rel (%p951) target = $region56
        $region55: #{tpu_custom_call.1} parent=39 // pred_region
          %s954 = smul.u32 4, %s35
          %956 = vsyncadd %s947, 0
          %s957 = sadd.s32 %s34, %s954
          %s958 = smul.addr %s957, 8
          %s959 = scalar_lea.hbm %s6, %s958
          %s960 = sshll.u32 %s950, 4
          %s961 = int_to_ptr.vmem [resolvable:$true] %s960
          %s962 = sshll.u32 %s959, 4
          %s963 = int_to_ptr.hbm [resolvable:$true] %s962
          %968 = dma.vmem_to_hbm [thread:$0]  %s961, 512, %s963, %s947, 128, 128, 8
        $region56: #{tpu_custom_call.1} parent=39 // pred_fallthru
          _
      $region40: #{tpu_custom_call.1} parent=5 // pred_fallthru
        _
      %p969 = scmp.le.s32.totalorder 2, %s25
      // Predicated region
      $region57: #{tpu_custom_call.1} parent=5 // pred_check
        %p970 = pneg %p969
      $region58: #{tpu_custom_call.1} parent=5 // pred_check_branch
        %972 = sbr.rel (%p970) target = $region60
      $region59: #{tpu_custom_call.1} parent=5 // pred_region
        %s973 = ssub.s32 %s25, 2
        // Predicated region
        $region61: #{tpu_custom_call.1} parent=59 // pred_check
          %p974 = pneg %p187
        $region62: #{tpu_custom_call.1} parent=59 // pred_check_branch
          %976 = sbr.rel (%p974) target = $region64
        $region63: #{tpu_custom_call.1} parent=59 // pred_region
          %s977 = sand.u32 %s172, 1
          %s978 = scalar_lea.sflag [#allocation7], %s977
          %s979 = sand.u32 %s172, 1
          %s980 = smul.addr %s979, 32
          %s981 = scalar_lea.vmem [#allocation10], %s980
          %983 = dma.done %s978, 512
        $region64: #{tpu_custom_call.1} parent=59 // pred_fallthru
          _
      $region60: #{tpu_custom_call.1} parent=5 // pred_fallthru
        _
    $region6: #{tpu_custom_call.1} parent=1 // loop_footer
      %s29 = sadd.s32 1, %s25
    $region7: #{tpu_custom_call.1} parent=1 // loop_footer_branch
      %24 = sbr.rel target = $region3
    $region8: #{tpu_custom_call.1} parent=1 // loop_exit
      _
    %984 = vsyncpa [#allocation6], 1
    %s985 = scalar_lea.sflag [#allocation6], 1
    %986 = vsyncpa %s985, 1
    %987 = vsyncpa [#allocation9], 1
    %988 = vsyncpa [#allocation7], 1
    %s989 = scalar_lea.sflag [#allocation7], 1
    %990 = vsyncpa %s989, 1

</llo_original>
